<compile_context>
chip_gen: v6e
topology: v6e:2x2x1
jax: 0.10.0
libtpu: 0.0.40
codegen_flags: <defaults>
</compile_context>

<pallas_src>
import jax
import jax.numpy as jnp
from jax import lax
from jax.experimental import pallas as pl
from jax.experimental.pallas import tpu as pltpu


_VMEM_BUDGET = 40 * 1024 * 1024   # target tile footprint; safe on v7x (64 MiB/TC)
_VMEM_LIMIT = 48 * 1024 * 1024    # scoped VMEM limit (<= ~56 MiB per v7x guidance)


def _round_up(v, m):
    return ((v + m - 1) // m) * m


def _choose_tiling(s, max_block):
    """Pick (tile, padded) with tile a multiple of 128 dividing padded,
    minimizing padding (avoids over-padding like 300 -> 512)."""
    m = max(128, (max_block // 128) * 128)
    s128 = _round_up(s, 128)
    if s128 <= m:
        return s128, s128            # single full-extent block
    best_pad, best_tile = None, None
    for t in range(m, 127, -128):    # larger tiles preferred on ties
        pad = _round_up(s, t)
        if best_pad is None or pad < best_pad:
            best_pad, best_tile = pad, t
    return best_tile, best_pad


def _select_plan(n, d, block_n, block_k, isz, budget, panel_resident):
    """Choose (tn, n_pad, tk, d_pad, single_k) under the VMEM budget."""
    bn = max(128, (block_n // 128) * 128)
    bk = max(128, (block_k // 128) * 128)
    while True:
        tn, n_pad = _choose_tiling(n, bn)
        d128 = _round_up(d, 128)
        # Path A: both (tn, d_pad) feature panels resident, no k axis.
        fp_panel = 4 * tn * d128 * isz + 2 * tn * tn * 4
        if panel_resident is not False and fp_panel <= budget:
            return tn, n_pad, d128, d128, True
        # Path B: stream the feature axis with an f32 accumulator.
        tk, d_pad = _choose_tiling(d, bk)
        while tk > 128 and 4 * tn * tk * isz + 3 * tn * tn * 4 > budget:
            tk -= 128
            d_pad = _round_up(d, tk)
        if 4 * tn * tk * isz + 3 * tn * tn * 4 <= budget or bn <= 128:
            return tn, n_pad, tk, d_pad, False
        bn -= 128                    # shrink row tile and retry


def _gram_tile_kernel(ib_ref, jb_ref, xi_ref, xj_ref, o_ref):
    # One (tn, tn) Gram tile: contract the full feature panel on the MXU.
    # dot_general contracts axis 1 of BOTH operands (no explicit transpose).
    o_ref[...] = lax.dot_general(
        xi_ref[...], xj_ref[...],
        dimension_numbers=(((1,), (1,)), ((), ())),
        preferred_element_type=jnp.float32,
    ).astype(o_ref.dtype)


def _gram_tile_acc_kernel(ib_ref, jb_ref, xi_ref, xj_ref, o_ref, acc_ref):
    k = pl.program_id(1)

    @pl.when(k == 0)
    def _():
        acc_ref[...] = jnp.zeros_like(acc_ref)

    acc_ref[...] += lax.dot_general(
        xi_ref[...], xj_ref[...],
        dimension_numbers=(((1,), (1,)), ((), ())),
        preferred_element_type=jnp.float32,
    )

    @pl.when(k == pl.num_programs(1) - 1)
    def _():
        o_ref[...] = acc_ref[...].astype(o_ref.dtype)


def linear_kernel(x, *, block_n=512, block_k=1024, use_symmetry=None,
                  compute_dtype=None, panel_resident=None):
    """JAX/Pallas equivalent of LinearKernel.forward(X): K = X @ X.T.

    compute_dtype: None (f32, matches reference numerics) or jnp.bfloat16 for
      the fast MXU path (f32 accumulation).
    use_symmetry: None = auto (only when compute-bound); True/False to force.
    panel_resident: None = auto (use the 2-D panel-resident path when it fits
      VMEM); False forces the k-streamed accumulator path.
    """
    x = jnp.asarray(x)
    if x.dtype != jnp.float32:
        x = x.astype(jnp.float32)
    n, d = x.shape

    cdt = jnp.float32 if compute_dtype is None else jnp.dtype(compute_dtype)
    isz = jnp.dtype(cdt).itemsize

    tn, n_pad, tk, d_pad, single_k = _select_plan(
        n, d, block_n, block_k, isz, _VMEM_BUDGET, panel_resident)
    nb = n_pad // tn
    nk = d_pad // tk

    if use_symmetry is None:
        # Mirroring in the wrapper costs ~3 extra O(N^2) HBM passes; only pay
        # when halving the MXU work clearly dominates (compute-bound regime).
        use_symmetry = (nb >= 2) and (d_pad >= 4 * tn)

    # Zero padding is numerically exact for a Gram matrix: padded feature
    # columns add nothing to the dots; padded rows only create rows/cols that
    # are sliced off below.  Skip the pad entirely when already aligned.
    xp = x if cdt == jnp.float32 else x.astype(cdt)
    if (n_pad, d_pad) != (n, d):
        xp = jnp.pad(xp, ((0, n_pad - n), (0, d_pad - d)))

    # Scalar-prefetched (block_i, block_j) tables: upper triangle only when
    # exploiting symmetry, otherwise the full nb x nb sweep (i-major so the
    # xi panel/tiles are reused across consecutive grid steps).
    pairs = [(i, j)
             for i in range(nb)
             for j in (range(i, nb) if use_symmetry else range(nb))]
    t_steps = len(pairs)
    bi = jnp.asarray([p[0] for p in pairs], dtype=jnp.int32)
    bj = jnp.asarray([p[1] for p in pairs], dtype=jnp.int32)

    cost = pl.CostEstimate(
        flops=2 * t_steps * tn * tn * d_pad,
        transcendentals=0,
        bytes_accessed=2 * t_steps * tn * d_pad * isz + t_steps * tn * tn * 4,
    )

    if single_k:
        grid_spec = pltpu.PrefetchScalarGridSpec(
            num_scalar_prefetch=2,
            grid=(t_steps,),
            in_specs=[
                pl.BlockSpec((tn, d_pad), lambda t, ib, jb: (ib[t], 0)),
                pl.BlockSpec((tn, d_pad), lambda t, ib, jb: (jb[t], 0)),
            ],
            out_specs=pl.BlockSpec((tn, tn), lambda t, ib, jb: (ib[t], jb[t])),
        )
        kernel = _gram_tile_kernel
        dims = ("parallel",)
    else:
        grid_spec = pltpu.PrefetchScalarGridSpec(
            num_scalar_prefetch=2,
            grid=(t_steps, nk),
            in_specs=[
                pl.BlockSpec((tn, tk), lambda t, k, ib, jb: (ib[t], k)),
                pl.BlockSpec((tn, tk), lambda t, k, ib, jb: (jb[t], k)),
            ],
            out_specs=pl.BlockSpec((tn, tn),
                                   lambda t, k, ib, jb: (ib[t], jb[t])),
            scratch_shapes=[pltpu.VMEM((tn, tn), jnp.float32)],
        )
        kernel = _gram_tile_acc_kernel
        dims = ("parallel", "arbitrary")

    k_pad = pl.pallas_call(
        kernel,
        out_shape=jax.ShapeDtypeStruct((n_pad, n_pad), jnp.float32),
        grid_spec=grid_spec,
        compiler_params=pltpu.CompilerParams(
            dimension_semantics=dims,
            vmem_limit_bytes=_VMEM_LIMIT,
        ),
        cost_estimate=cost,
    )(bi, bj, xp, xp)

    k_out = k_pad[:n, :n] if n_pad != n else k_pad
    if use_symmetry:
        # Lower-triangle blocks were never visited; fill them from the
        # transpose of the visited upper-triangle blocks (block-granular mask).
        rb = jnp.arange(n, dtype=jnp.int32) // tn
        upper = rb[:, None] <= rb[None, :]
        k_out = jnp.where(upper, k_out, k_out.T)
    return k_out


def _reference(x):
    x = jnp.asarray(x, jnp.float32)
    return x @ x.T


if __name__ == "__main__":
    key = jax.random.PRNGKey(0)
    k1, k2 = jax.random.split(key)

    # Small shape consistent with the module: X is (num_samples, feature_dim).
    X = jax.random.normal(k1, (8, 32), dtype=jnp.float32)
    K = jax.block_until_ready(linear_kernel(X))
    K_ref = jax.block_until_ready(_reference(X))
    assert K.shape == (8, 8), K.shape
    assert jnp.allclose(K, K_ref, rtol=1e-5, atol=1e-5), "small-case mismatch"

    # Non-aligned shape: exercises padding + the panel-resident single-dot path.
    X2 = jax.random.normal(k2, (300, 200), dtype=jnp.float32)
    K2_ref = jax.block_until_ready(_reference(X2))
    K2 = jax.block_until_ready(linear_kernel(X2))
    assert K2.shape == (300, 300), K2.shape
    assert jnp.allclose(K2, K2_ref, rtol=1e-4, atol=1e-4), "panel-path mismatch"

    # Force the multi-tile, k-streamed accumulator path with symmetry + mirror.
    K3 = jax.block_until_ready(
        linear_kernel(X2, block_n=128, block_k=128,
                      use_symmetry=True, panel_resident=False))
    assert jnp.allclose(K3, K2_ref, rtol=1e-4, atol=1e-4), "streamed/symmetric mismatch"

    # Optional bf16 MXU path (f32 accumulation) vs a bf16-rounded reference.
    Xb = X2.astype(jnp.bfloat16).astype(jnp.float32)
    K4 = jax.block_until_ready(linear_kernel(X2, compute_dtype=jnp.bfloat16))
    assert jnp.allclose(K4, Xb @ Xb.T, rtol=1e-2, atol=1e-2), "bf16-path mismatch"

    print("KERNEL_OK")
</pallas_src>

<mosaic_0001>
module attributes {stable_mosaic.version = 11 : i64} {
  func.func @_gram_tile_kernel(%arg0: i32, %arg1: memref<1xi32, #tpu.memory_space<smem>>, %arg2: memref<1xi32, #tpu.memory_space<smem>>, %arg3: memref<128x128xf32, #tpu.memory_space<vmem>>, %arg4: memref<128x128xf32, #tpu.memory_space<vmem>>, %arg5: memref<128x128xf32, #tpu.memory_space<vmem>>) attributes {dimension_semantics = [#tpu.dimension_semantics<parallel>], iteration_bounds = array<i64: 1>, scalar_prefetch = 2 : i64, scratch_operands = 0 : i64, tpu.core_type = #tpu.core_type<tc>, window_params = [{transform_indices = @transform_0, window_bounds = array<i64: 128, 128>}, {transform_indices = @transform_1, window_bounds = array<i64: 128, 128>}, {transform_indices = @transform_2, window_bounds = array<i64: 128, 128>}]} {
    %c0 = arith.constant 0 : index
    %c0_0 = arith.constant 0 : index
    %0 = vector.load %arg3[%c0, %c0_0] : memref<128x128xf32, #tpu.memory_space<vmem>>, vector<128x128xf32>
    %c0_1 = arith.constant 0 : index
    %c0_2 = arith.constant 0 : index
    %1 = vector.load %arg4[%c0_1, %c0_2] : memref<128x128xf32, #tpu.memory_space<vmem>>, vector<128x128xf32>
    %cst = arith.constant dense<0.000000e+00> : vector<128x128xf32>
    %2 = tpu.matmul %0, %1, %cst {dimension_numbers = #tpu.dot_dimension_numbers<[1], [1], [0], [0], [0, 0, 1, 0], [], []>} : vector<128x128xf32>, vector<128x128xf32>, vector<128x128xf32> -> vector<128x128xf32>
    %c0_3 = arith.constant 0 : index
    %c0_4 = arith.constant 0 : index
    %3 = vector.load %arg5[%c0_3, %c0_4] : memref<128x128xf32, #tpu.memory_space<vmem>>, vector<128x128xf32>
    tpu.vector_store %arg5[%c0_3, %c0_4], %2 {strides = array<i32>} : memref<128x128xf32, #tpu.memory_space<vmem>>, vector<128x128xf32>,
    return
  }
  func.func @transform_0(%arg0: i32, %arg1: memref<1xi32, #tpu.memory_space<smem>>, %arg2: memref<1xi32, #tpu.memory_space<smem>>) -> (i32, i32) {
    %0 = arith.index_cast %arg0 : i32 to index
    %1 = memref.load %arg1[%0] : memref<1xi32, #tpu.memory_space<smem>>
    %c0_i32 = arith.constant 0 : i32
    %c0_i32_0 = arith.constant 0 : i32
    return %1, %c0_i32 : i32, i32
  }
  func.func @transform_1(%arg0: i32, %arg1: memref<1xi32, #tpu.memory_space<smem>>, %arg2: memref<1xi32, #tpu.memory_space<smem>>) -> (i32, i32) {
    %0 = arith.index_cast %arg0 : i32 to index
    %1 = memref.load %arg2[%0] : memref<1xi32, #tpu.memory_space<smem>>
    %c0_i32 = arith.constant 0 : i32
    %c0_i32_0 = arith.constant 0 : i32
    return %1, %c0_i32 : i32, i32
  }
  func.func @transform_2(%arg0: i32, %arg1: memref<1xi32, #tpu.memory_space<smem>>, %arg2: memref<1xi32, #tpu.memory_space<smem>>) -> (i32, i32) {
    %0 = arith.index_cast %arg0 : i32 to index
    %1 = memref.load %arg1[%0] : memref<1xi32, #tpu.memory_space<smem>>
    %2 = arith.index_cast %arg0 : i32 to index
    %3 = memref.load %arg2[%2] : memref<1xi32, #tpu.memory_space<smem>>
    %c0_i32 = arith.constant 0 : i32
    return %1, %3 : i32, i32
  }
}

</mosaic_0001>

<llo_original>
// kernel: tpu_custom_call.1
$region0: #{tpu_custom_call.1}
  #allocation0 [shape = 'u32[]', space=smem, size = 0x4, offset = 0x4, fixed_abs, tag = 'smem constant byte address 0x4 - core index']
  #allocation1 [shape = 'u32[144,128]{1,0:T(1,128)}', space=vmem, size = 0x12000, scoped, tag = 'internal scratch']
  #allocation2 [shape = 's32[1]{0}', space=sflag, size = 0x4, scoped, tag = 'scoped memory for tpu_custom_call.1']
  #allocation3 [shape = 's32[1]{0:T(128)S(6)}', space=smem, size = 0x200, scoped, tag = 'prefetched SMEM operand 0']
  #allocation4 [shape = 's32[1]{0:T(128)S(6)}', space=smem, size = 0x200, scoped, tag = 'prefetched SMEM operand 1']
  %s0 = inlined_call_operand.<no memory space> [shape: s32[1], index: 0, kind: input, shape index: {}]
  %s1 = inlined_call_operand.<no memory space> [shape: s32[1], index: 1, kind: input, shape index: {}]
  %s2 = inlined_call_operand.hbm [shape: f32[128,128], index: 2, kind: input, shape index: {}]
  %s3 = inlined_call_operand.hbm [shape: f32[128,128], index: 3, kind: input, shape index: {}]
  %s4 = inlined_call_operand.hbm [shape: f32[128,128], index: 4, kind: output, shape index: {}]
  %s5 = sld [smem:[#allocation0]]
  $region26: #{tpu_custom_call.1} parent=0
    _
  %s7 = ssub.s32 1, %s5
  %s8 = scalar_select 0, %s7, %s5
  %9 = sst [smem:[#allocation3]] %s0
  %10 = sst [smem:[#allocation4]] %s1
  $region1: #{tpu_custom_call.1} parent=0
    #allocation5 [shape = 'u8[65536]{0}', space=vmem, size = 0x10000, scoped, tag = 'input window, operand 2, single buffered']
    #allocation6 [shape = 's32[1]{0}', space=sflag, size = 0x4, scoped, tag = 'scoped memory for tpu_custom_call.1']
    #allocation7 [shape = 's32[1]{0}', space=sflag, size = 0x4, scoped, tag = 'scoped memory for tpu_custom_call.1']
    #allocation8 [shape = 'u8[65536]{0}', space=vmem, size = 0x10000, scoped, tag = 'input window, operand 3, single buffered']
    #allocation9 [shape = 's32[1]{0}', space=sflag, size = 0x4, scoped, tag = 'scoped memory for tpu_custom_call.1']
    #allocation10 [shape = 'u8[65536]{0}', space=vmem, size = 0x10000, scoped, tag = 'output window, operand 0, single buffered']
    %11 = vsyncpa [#allocation6], 0
    %12 = vsyncpa [#allocation9], 0
    %13 = vsyncpa [#allocation7], 0
    // Predicated region
    $region2: #{tpu_custom_call.1} parent=1 // pred_check
      _
    $region3: #{tpu_custom_call.1} parent=1 // pred_check_branch
      %15 = sbr.rel (0) target = $region5
    $region4: #{tpu_custom_call.1} parent=1 // pred_region
      %s16 = sld [smem:[#allocation3]]
      %s17 = smul.u32 16, %s16
      %s19 = ssub.s32 2048, 2048
      %20 = vsyncadd [#allocation6], %s19
      %s21 = smul.addr %s17, 128
      %s22 = scalar_lea.hbm %s2, %s21
      %s23 = sshll.u32 [#allocation5], 4
      %s24 = int_to_ptr.vmem [resolvable:$true] %s23
      %29 = dma.hbm_to_vmem [thread:$0]  %s22, 2048, %s24, [#allocation6], 128, 128, 8
    $region5: #{tpu_custom_call.1} parent=1 // pred_fallthru
      _
    // Predicated region
    $region6: #{tpu_custom_call.1} parent=1 // pred_check
      _
    $region7: #{tpu_custom_call.1} parent=1 // pred_check_branch
      %31 = sbr.rel (0) target = $region9
    $region8: #{tpu_custom_call.1} parent=1 // pred_region
      %s32 = sld [smem:[#allocation4]]
      %s33 = smul.u32 16, %s32
      %s35 = ssub.s32 2048, 2048
      %36 = vsyncadd [#allocation9], %s35
      %s37 = smul.addr %s33, 128
      %s38 = scalar_lea.hbm %s3, %s37
      %s39 = sshll.u32 [#allocation8], 4
      %s40 = int_to_ptr.vmem [resolvable:$true] %s39
      %45 = dma.hbm_to_vmem [thread:$0]  %s38, 2048, %s40, [#allocation9], 128, 128, 8
    $region9: #{tpu_custom_call.1} parent=1 // pred_fallthru
      _
    // Predicated region
    $region10: #{tpu_custom_call.1} parent=1 // pred_check
      _
    $region11: #{tpu_custom_call.1} parent=1 // pred_check_branch
      %47 = sbr.rel (0) target = $region13
    $region12: #{tpu_custom_call.1} parent=1 // pred_region
      %48 = dma.done [#allocation6], 2048
    $region13: #{tpu_custom_call.1} parent=1 // pred_fallthru
      _
    // Predicated region
    $region14: #{tpu_custom_call.1} parent=1 // pred_check
      _
    $region15: #{tpu_custom_call.1} parent=1 // pred_check_branch
      %50 = sbr.rel (0) target = $region17
    $region16: #{tpu_custom_call.1} parent=1 // pred_region
      %51 = dma.done [#allocation9], 2048
    $region17: #{tpu_custom_call.1} parent=1 // pred_fallthru
      _
    %s52 = sld [smem:[#allocation3]]
    %s53 = smul.u32 16, %s52
    %s54 = sld [smem:[#allocation4]]
    %s55 = smul.u32 16, %s54
    %s56 = sld [smem:[#allocation3]]
    %s57 = sld [smem:[#allocation4]]
    %s58 = smul.u32 16, %s56
    %v59 = vld [vmem:[#allocation5] sm:$0xff]
    %v60 = vld [vmem:[#allocation5 + $0x8] sm:$0xff]
    %v61 = vld [vmem:[#allocation5 + $0x10] sm:$0xff]
    %v62 = vld [vmem:[#allocation5 + $0x18] sm:$0xff]
    %v63 = vld [vmem:[#allocation5 + $0x20] sm:$0xff]
    %v64 = vld [vmem:[#allocation5 + $0x28] sm:$0xff]
    %v65 = vld [vmem:[#allocation5 + $0x30] sm:$0xff]
    %v66 = vld [vmem:[#allocation5 + $0x38] sm:$0xff]
    %v67 = vld [vmem:[#allocation5 + $0x40] sm:$0xff]
    %v68 = vld [vmem:[#allocation5 + $0x48] sm:$0xff]
    %v69 = vld [vmem:[#allocation5 + $0x50] sm:$0xff]
    %v70 = vld [vmem:[#allocation5 + $0x58] sm:$0xff]
    %v71 = vld [vmem:[#allocation5 + $0x60] sm:$0xff]
    %v72 = vld [vmem:[#allocation5 + $0x68] sm:$0xff]
    %v73 = vld [vmem:[#allocation5 + $0x70] sm:$0xff]
    %v74 = vld [vmem:[#allocation5 + $0x78] sm:$0xff]
    %v75 = vld [vmem:[#allocation8] sm:$0xff]
    %v76 = vld [vmem:[#allocation8 + $0x8] sm:$0xff]
    %v77 = vld [vmem:[#allocation8 + $0x10] sm:$0xff]
    %v78 = vld [vmem:[#allocation8 + $0x18] sm:$0xff]
    %v79 = vld [vmem:[#allocation8 + $0x20] sm:$0xff]
    %v80 = vld [vmem:[#allocation8 + $0x28] sm:$0xff]
    %v81 = vld [vmem:[#allocation8 + $0x30] sm:$0xff]
    %v82 = vld [vmem:[#allocation8 + $0x38] sm:$0xff]
    %v83 = vld [vmem:[#allocation8 + $0x40] sm:$0xff]
    %v84 = vld [vmem:[#allocation8 + $0x48] sm:$0xff]
    %v85 = vld [vmem:[#allocation8 + $0x50] sm:$0xff]
    %v86 = vld [vmem:[#allocation8 + $0x58] sm:$0xff]
    %v87 = vld [vmem:[#allocation8 + $0x60] sm:$0xff]
    %v88 = vld [vmem:[#allocation8 + $0x68] sm:$0xff]
    %v89 = vld [vmem:[#allocation8 + $0x70] sm:$0xff]
    %v90 = vld [vmem:[#allocation8 + $0x78] sm:$0xff]
    %91 = vmatprep.subr.mxu0 0.0
    %92 = vmatpush1.xpose.msra.mxu0 %v90
    %93 = vmatprep.subr.mxu0 0.0
    %94 = vmatpush1.xpose.msra.mxu0 %v89
    %95 = vmatprep.subr.mxu0 0.0
    %96 = vmatpush1.xpose.msra.mxu0 %v88
    %97 = vmatprep.subr.mxu0 0.0
    %98 = vmatpush1.xpose.msra.mxu0 %v87
    %99 = vmatprep.subr.mxu0 0.0
    %100 = vmatpush1.xpose.msra.mxu0 %v86
    %101 = vmatprep.subr.mxu0 0.0
    %102 = vmatpush1.xpose.msra.mxu0 %v85
    %103 = vmatprep.subr.mxu0 0.0
    %104 = vmatpush1.xpose.msra.mxu0 %v84
    %105 = vmatprep.subr.mxu0 0.0
    %106 = vmatpush1.xpose.msra.mxu0 %v83
    %107 = vmatprep.subr.mxu0 0.0
    %108 = vmatpush1.xpose.msra.mxu0 %v82
    %109 = vmatprep.subr.mxu0 0.0
    %110 = vmatpush1.xpose.msra.mxu0 %v81
    %111 = vmatprep.subr.mxu0 0.0
    %112 = vmatpush1.xpose.msra.mxu0 %v80
    %113 = vmatprep.subr.mxu0 0.0
    %114 = vmatpush1.xpose.msra.mxu0 %v79
    %115 = vmatprep.subr.mxu0 0.0
    %116 = vmatpush1.xpose.msra.mxu0 %v78
    %117 = vmatprep.subr.mxu0 0.0
    %118 = vmatpush1.xpose.msra.mxu0 %v77
    %119 = vmatprep.subr.mxu0 0.0
    %120 = vmatpush1.xpose.msra.mxu0 %v76
    %121 = vmatprep.subr.mxu0 0.0
    %122 = vmatpush1.xpose.msra.mxu0 %v75
    %123 = vmatprep.subr.mxu0 0.0
    %124 = vmatpush2.xpose.msra.mxu0 0.0
    %125 = vmatprep.subr.mxu0 0.0
    %126 = vmatpush2.xpose.msra.mxu0 0.0
    %127 = vmatprep.subr.mxu0 0.0
    %128 = vmatpush2.xpose.msra.mxu0 0.0
    %129 = vmatprep.subr.mxu0 0.0
    %130 = vmatpush2.xpose.msra.mxu0 0.0
    %131 = vmatprep.subr.mxu0 0.0
    %132 = vmatpush2.xpose.msra.mxu0 0.0
    %133 = vmatprep.subr.mxu0 0.0
    %134 = vmatpush2.xpose.msra.mxu0 0.0
    %135 = vmatprep.subr.mxu0 0.0
    %136 = vmatpush2.xpose.msra.mxu0 0.0
    %137 = vmatprep.subr.mxu0 0.0
    %138 = vmatpush2.xpose.msra.mxu0 0.0
    %139 = vmatprep.subr.mxu0 0.0
    %140 = vmatpush2.xpose.msra.mxu0 0.0
    %141 = vmatprep.subr.mxu0 0.0
    %142 = vmatpush2.xpose.msra.mxu0 0.0
    %143 = vmatprep.subr.mxu0 0.0
    %144 = vmatpush2.xpose.msra.mxu0 0.0
    %145 = vmatprep.subr.mxu0 0.0
    %146 = vmatpush2.xpose.msra.mxu0 0.0
    %147 = vmatprep.subr.mxu0 0.0
    %148 = vmatpush2.xpose.msra.mxu0 0.0
    %149 = vmatprep.subr.mxu0 0.0
    %150 = vmatpush2.xpose.msra.mxu0 0.0
    %151 = vmatprep.subr.mxu0 0.0
    %152 = vmatpush2.xpose.msra.mxu0 0.0
    %153 = vmatprep.subr.mxu0 0.0
    %154 = vmatpush2.xpose.msra.mxu0 0.0
    %155 = vmatprep.mubr.f32.mxu0 0.0
    %156 = vmatmul.mubr.f32.gmra.mxu0 %v59
    %v157 = vpop.f32.mrf.mxu0
    %v158 = vadd.f32 0.0, %v157
    %v159 = vpop.f32.mrf.mxu0
    %160 = vmatprep.mubr.f32.mxu0 0.0
    %161 = vmatmul.mubr.f32.gmra.mxu0 %v60
    %v162 = vpop.f32.mrf.mxu0
    %v163 = vadd.f32 0.0, %v162
    %v164 = vpop.f32.mrf.mxu0
    %165 = vmatprep.mubr.f32.mxu0 0.0
    %166 = vmatmul.mubr.f32.gmra.mxu0 %v61
    %v167 = vpop.f32.mrf.mxu0
    %v168 = vadd.f32 0.0, %v167
    %v169 = vpop.f32.mrf.mxu0
    %170 = vmatprep.mubr.f32.mxu0 0.0
    %171 = vmatmul.mubr.f32.gmra.mxu0 %v62
    %v172 = vpop.f32.mrf.mxu0
    %v173 = vadd.f32 0.0, %v172
    %v174 = vpop.f32.mrf.mxu0
    %175 = vmatprep.mubr.f32.mxu0 0.0
    %176 = vmatmul.mubr.f32.gmra.mxu0 %v63
    %v177 = vpop.f32.mrf.mxu0
    %v178 = vadd.f32 0.0, %v177
    %v179 = vpop.f32.mrf.mxu0
    %180 = vmatprep.mubr.f32.mxu0 0.0
    %181 = vmatmul.mubr.f32.gmra.mxu0 %v64
    %v182 = vpop.f32.mrf.mxu0
    %v183 = vadd.f32 0.0, %v182
    %v184 = vpop.f32.mrf.mxu0
    %185 = vmatprep.mubr.f32.mxu0 0.0
    %186 = vmatmul.mubr.f32.gmra.mxu0 %v65
    %v187 = vpop.f32.mrf.mxu0
    %v188 = vadd.f32 0.0, %v187
    %v189 = vpop.f32.mrf.mxu0
    %190 = vmatprep.mubr.f32.mxu0 0.0
    %191 = vmatmul.mubr.f32.gmra.mxu0 %v66
    %v192 = vpop.f32.mrf.mxu0
    %v193 = vadd.f32 0.0, %v192
    %v194 = vpop.f32.mrf.mxu0
    %195 = vmatprep.mubr.f32.mxu0 0.0
    %196 = vmatmul.mubr.f32.gmra.mxu0 %v67
    %v197 = vpop.f32.mrf.mxu0
    %v198 = vadd.f32 0.0, %v197
    %v199 = vpop.f32.mrf.mxu0
    %200 = vmatprep.mubr.f32.mxu0 0.0
    %201 = vmatmul.mubr.f32.gmra.mxu0 %v68
    %v202 = vpop.f32.mrf.mxu0
    %v203 = vadd.f32 0.0, %v202
    %v204 = vpop.f32.mrf.mxu0
    %205 = vmatprep.mubr.f32.mxu0 0.0
    %206 = vmatmul.mubr.f32.gmra.mxu0 %v69
    %v207 = vpop.f32.mrf.mxu0
    %v208 = vadd.f32 0.0, %v207
    %v209 = vpop.f32.mrf.mxu0
    %210 = vmatprep.mubr.f32.mxu0 0.0
    %211 = vmatmul.mubr.f32.gmra.mxu0 %v70
    %v212 = vpop.f32.mrf.mxu0
    %v213 = vadd.f32 0.0, %v212
    %v214 = vpop.f32.mrf.mxu0
    %215 = vmatprep.mubr.f32.mxu0 0.0
    %216 = vmatmul.mubr.f32.gmra.mxu0 %v71
    %v217 = vpop.f32.mrf.mxu0
    %v218 = vadd.f32 0.0, %v217
    %v219 = vpop.f32.mrf.mxu0
    %220 = vmatprep.mubr.f32.mxu0 0.0
    %221 = vmatmul.mubr.f32.gmra.mxu0 %v72
    %v222 = vpop.f32.mrf.mxu0
    %v223 = vadd.f32 0.0, %v222
    %v224 = vpop.f32.mrf.mxu0
    %225 = vmatprep.mubr.f32.mxu0 0.0
    %226 = vmatmul.mubr.f32.gmra.mxu0 %v73
    %v227 = vpop.f32.mrf.mxu0
    %v228 = vadd.f32 0.0, %v227
    %v229 = vpop.f32.mrf.mxu0
    %230 = vmatprep.mubr.f32.mxu0 0.0
    %231 = vmatmul.mubr.f32.gmra.mxu0 %v74
    %v232 = vpop.f32.mrf.mxu0
    %v233 = vadd.f32 0.0, %v232
    %v234 = vpop.f32.mrf.mxu0
    %235 = vdwg.mxu0
    %236 = vst [vmem:[#allocation10] sm:$0xff] %v158
    %237 = vst [vmem:[#allocation10 + $0x8] sm:$0xff] %v163
    %238 = vst [vmem:[#allocation10 + $0x10] sm:$0xff] %v168
    %239 = vst [vmem:[#allocation10 + $0x18] sm:$0xff] %v173
    %240 = vst [vmem:[#allocation10 + $0x20] sm:$0xff] %v178
    %241 = vst [vmem:[#allocation10 + $0x28] sm:$0xff] %v183
    %242 = vst [vmem:[#allocation10 + $0x30] sm:$0xff] %v188
    %243 = vst [vmem:[#allocation10 + $0x38] sm:$0xff] %v193
    %244 = vst [vmem:[#allocation10 + $0x40] sm:$0xff] %v198
    %245 = vst [vmem:[#allocation10 + $0x48] sm:$0xff] %v203
    %246 = vst [vmem:[#allocation10 + $0x50] sm:$0xff] %v208
    %247 = vst [vmem:[#allocation10 + $0x58] sm:$0xff] %v213
    %248 = vst [vmem:[#allocation10 + $0x60] sm:$0xff] %v218
    %249 = vst [vmem:[#allocation10 + $0x68] sm:$0xff] %v223
    %250 = vst [vmem:[#allocation10 + $0x70] sm:$0xff] %v228
    %251 = vst [vmem:[#allocation10 + $0x78] sm:$0xff] %v233
    // Predicated region
    $region18: #{tpu_custom_call.1} parent=1 // pred_check
      _
    $region19: #{tpu_custom_call.1} parent=1 // pred_check_branch
      %253 = sbr.rel (0) target = $region21
    $region20: #{tpu_custom_call.1} parent=1 // pred_region
      %s254 = sld [smem:[#allocation3]]
      %s255 = sld [smem:[#allocation4]]
      %s256 = smul.u32 16, %s254
      %s258 = ssub.s32 2048, 2048
      %259 = vsyncadd [#allocation7], %s258
      %s260 = sadd.s32 %s255, %s256
      %s261 = smul.addr %s260, 128
      %s262 = scalar_lea.hbm %s4, %s261
      %s263 = sshll.u32 [#allocation10], 4
      %s264 = int_to_ptr.vmem [resolvable:$true] %s263
      %269 = dma.vmem_to_hbm [thread:$0]  %s264, 2048, %s262, [#allocation7], 128, 128, 8
    $region21: #{tpu_custom_call.1} parent=1 // pred_fallthru
      _
    // Predicated region
    $region22: #{tpu_custom_call.1} parent=1 // pred_check
      _
    $region23: #{tpu_custom_call.1} parent=1 // pred_check_branch
      %271 = sbr.rel (0) target = $region25
    $region24: #{tpu_custom_call.1} parent=1 // pred_region
      %272 = dma.done [#allocation7], 2048
    $region25: #{tpu_custom_call.1} parent=1 // pred_fallthru
      _
    %273 = vsyncpa [#allocation6], 1
    %274 = vsyncpa [#allocation9], 1
    %275 = vsyncpa [#allocation7], 1

</llo_original>
